<compile_context>
chip_gen: v5e
topology: v5e:2x2
jax: 0.10.0
libtpu: 0.0.40
codegen_flags: <defaults>
</compile_context>

<pallas_src>
import jax
import jax.numpy as jnp
from jax.experimental import pallas as pl
from jax.experimental.pallas import tpu as pltpu


def _round_up(x: int, m: int) -> int:
    return (x + m - 1) // m * m


def _value_head_kernel(x_ref, w_ref, b_ref, o_ref):
    # x_ref: (tm, H) hidden-state rows, native dtype   (VMEM, pipelined)
    # w_ref: (H, 1)  value-head weight in x's dtype    (VMEM, resident)
    # b_ref: (1, 1)  f32 value-head bias               (SMEM scalar)
    # o_ref: (tm, 1) f32 scalar value per token
    o_ref[...] = (
        jnp.dot(x_ref[...], w_ref[...], preferred_element_type=jnp.float32)
        + b_ref[0, 0]
    )


def _pick_row_tile(M: int, H: int, itemsize: int) -> int:
    """Row tile sized by bytes: ~8 MiB of x per block, aligned to sublane packing."""
    align = 8 if itemsize >= 4 else 16          # bf16/fp8 pack along sublanes
    target_block_bytes = 8 * 1024 * 1024
    per_row_bytes = H * itemsize
    tm = max(align, (target_block_bytes // max(per_row_bytes, 1)) // align * align)
    # Never use a tile (much) larger than the problem itself.
    tm = min(tm, _round_up(M, align))
    return tm


def value_head_forward(hidden_states: jax.Array, weight: jax.Array, bias: jax.Array):
    """Apply nn.Linear(hidden_size, 1) to hidden_states and squeeze the last dim.

    hidden_states: (B, T, H)  any float dtype (read in native dtype)
    weight:        (1, H)     (PyTorch Linear weight layout)
    bias:          (1,)
    returns:       (B, T)     float32
    """
    B, T, H = hidden_states.shape
    M = B * T

    x = hidden_states.reshape(M, H)                    # no dtype cast: native read
    w = weight.reshape(H, 1).astype(x.dtype)           # tiny; match MXU operand dtype
    b = bias.reshape(1, 1).astype(jnp.float32)

    tm = _pick_row_tile(M, H, x.dtype.itemsize)
    grid = pl.cdiv(M, tm)                              # ragged last block, no jnp.pad

    out = pl.pallas_call(
        _value_head_kernel,
        out_shape=jax.ShapeDtypeStruct((M, 1), jnp.float32),
        grid_spec=pltpu.PrefetchScalarGridSpec(
            num_scalar_prefetch=0,
            grid=(grid,),
            in_specs=[
                pl.BlockSpec((tm, H), lambda i: (i, 0)),   # hidden rows (pipelined)
                pl.BlockSpec((H, 1), lambda i: (0, 0)),    # weight (resident)
                pl.BlockSpec(memory_space=pltpu.SMEM),     # bias (scalar in SMEM)
            ],
            out_specs=pl.BlockSpec((tm, 1), lambda i: (i, 0)),
        ),
        compiler_params=pltpu.CompilerParams(
            dimension_semantics=("parallel",),             # 2 TCs share rows on v7x
            vmem_limit_bytes=40 * 1024 * 1024,             # 2x8 MiB x-buffers + slack
        ),
    )(x, w, b)

    return out.reshape(B, T)


if __name__ == "__main__":
    # Small shapes consistent with the module: batch=2, seq(response)=8, hidden=32.
    B, T, H = 2, 8, 32

    key = jax.random.PRNGKey(0)
    hidden_states = jax.random.normal(key, (B, T, H), dtype=jnp.float32)

    # Deterministic parameter init matching Value.__init__:
    #   value_head.weight.data.zero_(); value_head.bias.data.zero_()
    weight = jnp.zeros((1, H), dtype=jnp.float32)
    bias = jnp.zeros((1,), dtype=jnp.float32)

    values = jax.block_until_ready(value_head_forward(hidden_states, weight, bias))
    ref = (hidden_states.reshape(-1, H) @ weight.T + bias).reshape(B, T)
    assert values.shape == (B, T)
    assert jnp.allclose(values, ref, atol=1e-6)

    # Non-trivial head (as after load_v_head); f32 read straight from HBM.
    # Tolerance covers a possible bf16-pass MXU default for the f32 dot.
    kw, kb = jax.random.split(jax.random.PRNGKey(1))
    weight2 = jax.random.normal(kw, (1, H), dtype=jnp.float32) * 0.1
    bias2 = jax.random.normal(kb, (1,), dtype=jnp.float32)
    values2 = jax.block_until_ready(value_head_forward(hidden_states, weight2, bias2))
    ref2 = (hidden_states.reshape(-1, H) @ weight2.T + bias2).reshape(B, T)
    assert jnp.allclose(values2, ref2, rtol=2e-2, atol=2e-2)

    # bf16 hidden states (AMP-style base model output): kernel reads bf16
    # directly and accumulates in f32 on the MXU.
    hs_bf16 = hidden_states.astype(jnp.bfloat16)
    values3 = jax.block_until_ready(value_head_forward(hs_bf16, weight2, bias2))
    ref3 = (hs_bf16.astype(jnp.float32).reshape(-1, H) @ weight2.T + bias2).reshape(B, T)
    assert jnp.allclose(values3, ref3, rtol=2e-2, atol=2e-2)

    print("KERNEL_OK")
</pallas_src>

<mosaic_0001>
module attributes {stable_mosaic.version = 11 : i64} {
  func.func @_value_head_kernel(%arg0: i32, %arg1: memref<16x32xf32, #tpu.memory_space<vmem>>, %arg2: memref<32x1xf32, #tpu.memory_space<vmem>>, %arg3: memref<1x1xf32, #tpu.memory_space<smem>>, %arg4: memref<16x1xf32, #tpu.memory_space<vmem>>) attributes {dimension_semantics = [#tpu.dimension_semantics<parallel>], iteration_bounds = array<i64: 1>, scalar_prefetch = 0 : i64, scratch_operands = 0 : i64, tpu.core_type = #tpu.core_type<tc>, window_params = [{transform_indices = @transform_0, window_bounds = array<i64: 16, 32>}, {pipeline_mode = #tpu.pipeline_mode<synchronous>, transform_indices = @transform_1, window_bounds = array<i64: 32, 1>}, {transform_indices = @transform_2, window_bounds = array<i64: 1, 1>}, {transform_indices = @transform_3, window_bounds = array<i64: 16, 1>}]} {
    %c0 = arith.constant 0 : index
    %c0_0 = arith.constant 0 : index
    %0 = vector.load %arg1[%c0, %c0_0] : memref<16x32xf32, #tpu.memory_space<vmem>>, vector<16x32xf32>
    %c0_1 = arith.constant 0 : index
    %c0_2 = arith.constant 0 : index
    %1 = vector.load %arg2[%c0_1, %c0_2] : memref<32x1xf32, #tpu.memory_space<vmem>>, vector<32x1xf32>
    %cst = arith.constant dense<0.000000e+00> : vector<16x1xf32>
    %2 = tpu.matmul %0, %1, %cst {dimension_numbers = #tpu.dot_dimension_numbers<[1], [0], [0], [1], [0, 0, 1, 1], [], []>} : vector<16x32xf32>, vector<32x1xf32>, vector<16x1xf32> -> vector<16x1xf32>
    %c0_3 = arith.constant 0 : index
    %c0_4 = arith.constant 0 : index
    %3 = memref.load %arg3[%c0_3, %c0_4] : memref<1x1xf32, #tpu.memory_space<smem>>
    %4 = vector.broadcast %3 : f32 to vector<16x1xf32>
    %5 = arith.addf %2, %4 : vector<16x1xf32>
    %c0_5 = arith.constant 0 : index
    %c0_6 = arith.constant 0 : index
    %6 = vector.load %arg4[%c0_5, %c0_6] : memref<16x1xf32, #tpu.memory_space<vmem>>, vector<16x1xf32>
    tpu.vector_store %arg4[%c0_5, %c0_6], %5 {strides = array<i32>} : memref<16x1xf32, #tpu.memory_space<vmem>>, vector<16x1xf32>,
    return
  }
  func.func @transform_0(%arg0: i32) -> (i32, i32) {
    %c0_i32 = arith.constant 0 : i32
    %c0_i32_0 = arith.constant 0 : i32
    return %arg0, %c0_i32 : i32, i32
  }
  func.func @transform_1(%arg0: i32) -> (i32, i32) {
    %c0_i32 = arith.constant 0 : i32
    %c0_i32_0 = arith.constant 0 : i32
    %c0_i32_1 = arith.constant 0 : i32
    return %c0_i32, %c0_i32_0 : i32, i32
  }
  func.func @transform_2(%arg0: i32) -> (i32, i32) {
    %c0_i32 = arith.constant 0 : i32
    %c0_i32_0 = arith.constant 0 : i32
    %c0_i32_1 = arith.constant 0 : i32
    return %c0_i32, %c0_i32_0 : i32, i32
  }
  func.func @transform_3(%arg0: i32) -> (i32, i32) {
    %c0_i32 = arith.constant 0 : i32
    %c0_i32_0 = arith.constant 0 : i32
    return %arg0, %c0_i32 : i32, i32
  }
}

</mosaic_0001>

<llo_original>
// kernel: tpu_custom_call.1
$region0: #{tpu_custom_call.1}
  #allocation0 [shape = 'u32[]', space=smem, size = 0x4, offset = 0x4, fixed_abs, tag = 'smem constant byte address 0x4 - core index']
  #allocation1 [shape = 'u32[72,128]{1,0:T(1,128)}', space=vmem, size = 0x9000, scoped, tag = 'internal scratch']
  #allocation2 [shape = 'f32[1,1]{1,0:T(1,128)S(6)}', space=smem, size = 0x200, scoped, tag = 'scoped memory for tpu_custom_call.1']
  %s0 = inlined_call_operand.vmem [shape: f32[16,32], index: 0, kind: input, shape index: {}]
  %s1 = inlined_call_operand.vmem [shape: f32[32,1], index: 1, kind: input, shape index: {}]
  %s2 = inlined_call_operand.<no memory space> [shape: f32[1,1], index: 2, kind: input, shape index: {}]
  %s3 = inlined_call_operand.vmem [shape: f32[16,1], index: 3, kind: output, shape index: {}]
  %s4 = sld [smem:[#allocation0]]
  $region22: #{tpu_custom_call.1} parent=0
    _
  %s6 = ssub.s32 1, %s4
  %s7 = scalar_select 0, %s6, %s4
  %8 = sst [smem:[#allocation2]] %s2
  // Predicated region
  $region2: #{tpu_custom_call.1} parent=0 // pred_check
    _
  $region3: #{tpu_custom_call.1} parent=0 // pred_check_branch
    %10 = sbr.rel (0) target = $region5
  $region4: #{tpu_custom_call.1} parent=0 // pred_region
    _
  $region5: #{tpu_custom_call.1} parent=0 // pred_fallthru
    _
  // Predicated region
  $region6: #{tpu_custom_call.1} parent=0 // pred_check
    _
  $region7: #{tpu_custom_call.1} parent=0 // pred_check_branch
    %12 = sbr.rel (0) target = $region9
  $region8: #{tpu_custom_call.1} parent=0 // pred_region
    _
  $region9: #{tpu_custom_call.1} parent=0 // pred_fallthru
    _
  // Predicated region
  $region10: #{tpu_custom_call.1} parent=0 // pred_check
    _
  $region11: #{tpu_custom_call.1} parent=0 // pred_check_branch
    %14 = sbr.rel (0) target = $region13
  $region12: #{tpu_custom_call.1} parent=0 // pred_region
    _
  $region13: #{tpu_custom_call.1} parent=0 // pred_fallthru
    _
  %v15 = vld [vmem:[%s0] sm:$0xff]
  %v16 = vld [vmem:[%s0 + $0x8] sm:$0xff]
  %v17 = vld [vmem:[%s1] sm:$0xff]
  %v18 = vld [vmem:[%s1 + $0x8] sm:$0xff]
  %v19 = vld [vmem:[%s1 + $0x10] sm:$0xff]
  %v20 = vld [vmem:[%s1 + $0x18] sm:$0xff]
  %s21 = sld [smem:[#allocation2]]
  %v22 = vstv %s21
  %vm23 = vcmask 261120
  %v25 = vsel %vm23, %v15, 0
  %v28 = vsel %vm23, %v16, 0
  %30 = vmatpush.msra.mxu0 0.0
  %31 = vmatpush.msra.mxu0 0.0
  %32 = vmatpush.msra.mxu0 0.0
  %33 = vmatpush.msra.mxu0 0.0
  %34 = vmatpush.msra.mxu0 0.0
  %35 = vmatpush.msra.mxu0 0.0
  %36 = vmatpush.msra.mxu0 0.0
  %37 = vmatpush.msra.mxu0 0.0
  %38 = vmatpush.msra.mxu0 0.0
  %39 = vmatpush.msra.mxu0 0.0
  %40 = vmatpush.msra.mxu0 0.0
  %41 = vmatpush.msra.mxu0 0.0
  %42 = vmatpush.msra.mxu0 %v20
  %43 = vmatpush.msra.mxu0 %v19
  %44 = vmatpush.msra.mxu0 %v18
  %45 = vmatpush.msra.mxu0 %v17
  %46 = vmatmul.f32.gmra.mxu0 %v25
  %v47 = vpop.f32.mrf.mxu0
  %v48 = vadd.f32 %v22, %v47
  %49 = vmatmul.f32.gmra.mxu0 %v28
  %v50 = vpop.f32.mrf.mxu0
  %v51 = vadd.f32 %v22, %v50
  %52 = vdwg.mxu0
  %vm53 = vcmask 7168
  %54 = vst.msk [vmem:[%s3] sm:$0xff] %vm53, %v48
  %55 = vst.msk [vmem:[%s3 + $0x8] sm:$0xff] %vm53, %v51
  // Predicated region
  $region14: #{tpu_custom_call.1} parent=0 // pred_check
    _
  $region15: #{tpu_custom_call.1} parent=0 // pred_check_branch
    %57 = sbr.rel (0) target = $region17
  $region16: #{tpu_custom_call.1} parent=0 // pred_region
    _
  $region17: #{tpu_custom_call.1} parent=0 // pred_fallthru
    _
  // Predicated region
  $region18: #{tpu_custom_call.1} parent=0 // pred_check
    _
  $region19: #{tpu_custom_call.1} parent=0 // pred_check_branch
    %59 = sbr.rel (0) target = $region21
  $region20: #{tpu_custom_call.1} parent=0 // pred_region
    _
  $region21: #{tpu_custom_call.1} parent=0 // pred_fallthru
    _

</llo_original>
